<compile_context>
chip_gen: v6e
topology: v6e:2x2x1
jax: 0.10.0
libtpu: 0.0.40
codegen_flags: <defaults>
</compile_context>

<pallas_src>
import numpy as np
import jax
import jax.numpy as jnp
from jax import lax
from jax.experimental import pallas as pl
from jax.experimental.pallas import tpu as pltpu


# ----------------------------------------------------------------------------
# Pallas kernel: fused  relu(X@W1+b1) -> relu(.@W2+b2) -> .@Wh+bh
# (input slab arrives in NCW as (C, tile_n); contraction over C, no transpose)
# ----------------------------------------------------------------------------
def _predict_head_kernel(x_ref, w1_ref, b1_ref, w2_ref, b2_ref, wh_ref, bh_ref,
                         o_ref):
    # x_ref block: (1, C, tile_n) f32 in the module's NCW layout.
    # Cast to bf16 FIRST (half the bytes through the load/store slots), then
    # contract over the channel axis directly -> (tile_n, C) without an
    # explicit f32 transpose.
    x = x_ref[0].astype(jnp.bfloat16)                          # (C, tile_n)
    h1 = lax.dot_general(x, w1_ref[...],
                         dimension_numbers=(((0,), (0,)), ((), ())),
                         preferred_element_type=jnp.float32) + b1_ref[...]
    h1 = jnp.maximum(h1, 0.0).astype(jnp.bfloat16)             # (tile_n, C)
    h2 = jnp.dot(h1, w2_ref[...],
                 preferred_element_type=jnp.float32) + b2_ref[...]
    h2 = jnp.maximum(h2, 0.0).astype(jnp.bfloat16)
    out = jnp.dot(h2, wh_ref[...],
                  preferred_element_type=jnp.float32) + bh_ref[...]
    o_ref[0] = out.astype(o_ref.dtype)                         # (tile_n, HP) bf16


def _fused_predict_head(features, w1t, b1, w2t, b2, wh, bh, *, tile_cap=1024):
    """features: (B, C, N) f32 NCW.  w1t, w2t: (C, C) bf16.  wh: (C, HP) bf16.
    b1, b2: (1, C) f32.  bh: (1, HP) f32.  Returns (B, N_pad, HP) bf16."""
    B, C, N = features.shape
    HP = wh.shape[1]

    # Pad proposals to a lane-dense multiple of 128 (dense vregs for the X slab
    # and all three matmuls; no masked stores).  Padding is sliced off by the
    # caller — the padded rows just produce throwaway logits.
    N_pad = ((N + 127) // 128) * 128
    if N_pad != N:
        features = jnp.pad(features, ((0, 0), (0, 0), (0, N_pad - N)))

    # Proposal tile: as large as possible (amortizes the ~0.35 us/step fixed
    # cost and streams more rows per resident weight set) while dividing N_pad.
    # Cap at 1024 so the double-buffered f32 X block + bf16 output block stay
    # a few MB — comfortably inside even v7x's smaller VMEM.
    tile_n = min(tile_cap, N_pad)
    while N_pad % tile_n != 0:
        tile_n -= 128

    # v7x megacore: keep >= 2 iterations along a parallel axis when B == 1.
    if B == 1 and (N_pad // tile_n) < 2 and tile_n > 128:
        t = (tile_n // 2 // 128) * 128
        while t > 128 and N_pad % t != 0:
            t -= 128
        if t >= 128 and N_pad % t == 0:
            tile_n = t

    grid = (B, N_pad // tile_n)
    const = lambda b, n: (0, 0)

    return pl.pallas_call(
        _predict_head_kernel,
        out_shape=jax.ShapeDtypeStruct((B, N_pad, HP), jnp.bfloat16),
        grid=grid,
        in_specs=[
            pl.BlockSpec((1, C, tile_n), lambda b, n: (b, 0, n)),  # X slab (NCW)
            pl.BlockSpec((C, C), const),     # W1 (folded BN1), bf16
            pl.BlockSpec((1, C), const),     # b1, f32
            pl.BlockSpec((C, C), const),     # W2 (folded BN2), bf16
            pl.BlockSpec((1, C), const),     # b2, f32
            pl.BlockSpec((C, HP), const),    # all-heads weight, bf16
            pl.BlockSpec((1, HP), const),    # all-heads bias, f32
        ],
        out_specs=pl.BlockSpec((1, tile_n, HP), lambda b, n: (b, n, 0)),
        compiler_params=pltpu.CompilerParams(
            dimension_semantics=("parallel", "parallel")),
    )(features, w1t, b1, w2t, b2, wh, bh)


# ----------------------------------------------------------------------------
# Parameter construction (deterministic, synthetic) + BN folding
# ----------------------------------------------------------------------------
def _init_params(key, seed_feat_dim, num_heading_bin, num_size_cluster,
                 num_class):
    C = seed_feat_dim
    ks = jax.random.split(key, 16)

    def conv_params(kw, kb, cout, cin):
        w = jax.random.normal(kw, (cout, cin), jnp.float32) * 0.02
        b = jax.random.normal(kb, (cout,), jnp.float32) * 0.01
        return w, b

    p = {}
    p["conv1_w"], p["conv1_b"] = conv_params(ks[0], ks[1], C, C)
    p["conv2_w"], p["conv2_b"] = conv_params(ks[2], ks[3], C, C)
    # BatchNorm1d (inference mode: running stats)
    for i, name in enumerate(["bn1", "bn2"]):
        p[f"{name}_gamma"] = 1.0 + 0.05 * jax.random.normal(ks[4 + 2 * i], (C,))
        p[f"{name}_beta"] = 0.05 * jax.random.normal(ks[5 + 2 * i], (C,))
        p[f"{name}_mean"] = 0.02 * jax.random.normal(ks[8 + i], (C,))
        p[f"{name}_var"] = 1.0 + 0.1 * jnp.abs(jax.random.normal(ks[10 + i], (C,)))

    heads = {
        "objectness": 1,
        "center": 3,
        "heading_cls": num_heading_bin,
        "heading_res": num_heading_bin,
        "size_cls": num_size_cluster,
        "size_res": num_size_cluster * 3,
        "sem_cls": num_class,
    }
    hk = jax.random.split(ks[12], 2 * len(heads))
    for j, (name, cout) in enumerate(heads.items()):
        p[f"{name}_w"], p[f"{name}_b"] = conv_params(hk[2 * j], hk[2 * j + 1],
                                                     cout, C)
    return p, heads


def _fold_bn(conv_w, conv_b, gamma, beta, mean, var, eps=1e-5):
    """bn(conv(x)) -> x @ W_eff^T + b_eff   (W_eff row = output channel)."""
    scale = gamma / jnp.sqrt(var + eps)              # (Cout,)
    w_eff = conv_w * scale[:, None]                  # (Cout, Cin)
    b_eff = conv_b * scale + (beta - mean * scale)   # (Cout,)
    return w_eff, b_eff


def _prepare_weights(params, heads, eps=1e-5):
    """One-time weight prep (hoisted out of the per-call path): fold BN in f32,
    concatenate all prediction heads into one lane-padded matmul, cast the
    matmul operands to bf16.  Biases stay f32 (added after f32-accumulated
    dots)."""
    w1, b1 = _fold_bn(params["conv1_w"], params["conv1_b"],
                      params["bn1_gamma"], params["bn1_beta"],
                      params["bn1_mean"], params["bn1_var"], eps)
    w2, b2 = _fold_bn(params["conv2_w"], params["conv2_b"],
                      params["bn2_gamma"], params["bn2_beta"],
                      params["bn2_mean"], params["bn2_var"], eps)

    head_order = list(heads.keys())
    head_slices = {}
    off = 0
    for n in head_order:
        head_slices[n] = (off, heads[n])
        off += heads[n]
    H = off

    wh = jnp.concatenate([params[f"{n}_w"] for n in head_order], axis=0)  # (H, C)
    bh = jnp.concatenate([params[f"{n}_b"] for n in head_order], axis=0)  # (H,)
    C = wh.shape[1]
    HP = ((H + 127) // 128) * 128     # lane-dense output width
    wh_p = jnp.zeros((C, HP), jnp.float32).at[:, :H].set(wh.T)
    bh_p = jnp.zeros((1, HP), jnp.float32).at[0, :H].set(bh)

    prepared = (w1.T.astype(jnp.bfloat16), b1[None, :],
                w2.T.astype(jnp.bfloat16), b2[None, :],
                wh_p.astype(jnp.bfloat16), bh_p)
    return prepared, head_slices, H


# ----------------------------------------------------------------------------
# Full forward (Pallas kernel + JAX glue, jitted)
# ----------------------------------------------------------------------------
def make_predict_head_forward(head_slices, num_heading_bin, num_size_cluster):
    NH, NS = num_heading_bin, num_size_cluster

    @jax.jit
    def forward(features, base_xyz, w1t, b1, w2t, b2, wh_p, bh_p,
                mean_size_arr):
        """features: (B, C, N) f32 (PyTorch NCW); base_xyz: (B, N, 3)."""
        B, C, N = features.shape
        raw_p = _fused_predict_head(features, w1t, b1, w2t, b2, wh_p, bh_p)
        # Drop padded proposals / padded lanes and upcast to f32.  Under jit
        # this fuses with the per-head slices below (no extra HBM pass).
        raw = raw_p[:, :N, :].astype(jnp.float32)

        def head(name):
            off, size = head_slices[name]
            return raw[:, :, off:off + size]

        objectness_scores = head("objectness")                    # (B, N, 1)
        center_residual = head("center")                          # (B, N, 3)
        center = base_xyz + center_residual
        heading_scores = head("heading_cls")                      # (B, N, NH)
        heading_residuals_normalized = head("heading_res")        # (B, N, NH)
        heading_residuals = heading_residuals_normalized * (np.pi / NH)
        size_scores = head("size_cls")                            # (B, N, NS)
        size_residuals_normalized = head("size_res").reshape(B, N, NS, 3)
        msa = mean_size_arr[None, None]                           # (1,1,NS,3)
        size_residuals = size_residuals_normalized * msa
        size_recover = size_residuals + msa
        pred_size_class = jnp.argmax(size_scores, axis=-1)        # (B, N)
        idx = jnp.broadcast_to(pred_size_class[..., None, None], (B, N, 1, 3))
        pred_size = jnp.squeeze(
            jnp.take_along_axis(size_recover, idx, axis=2), axis=2)
        sem_cls_scores = head("sem_cls")                          # (B,N,ncls)

        end_points = {
            "base_xyz": base_xyz,
            "objectness_scores": objectness_scores,
            "center": center,
            "heading_scores": heading_scores,
            "heading_residuals_normalized": heading_residuals_normalized,
            "heading_residuals": heading_residuals,
            "size_scores": size_scores,
            "size_residuals_normalized": size_residuals_normalized,
            "size_residuals": size_residuals,
            "pred_size": pred_size,
            "sem_cls_scores": sem_cls_scores,
        }
        # TODO(synk): use_ref_branch / use_cls_branch / use_ref_mask
        # sub-branches (off by default in the module) are not implemented.
        return (center, pred_size), end_points

    return forward


# ----------------------------------------------------------------------------
# Reference (pure JAX, same bf16-operand / f32-accum / bf16-store numerics)
# ----------------------------------------------------------------------------
def _reference_heads(features, w1t, b1, w2t, b2, wh, bh, H):
    B, C, N = features.shape
    x = jnp.transpose(features, (0, 2, 1)).reshape(B * N, C).astype(jnp.bfloat16)
    h = jnp.maximum(
        jnp.dot(x, w1t, preferred_element_type=jnp.float32) + b1, 0.0)
    h = jnp.maximum(
        jnp.dot(h.astype(jnp.bfloat16), w2t,
                preferred_element_type=jnp.float32) + b2, 0.0)
    out = jnp.dot(h.astype(jnp.bfloat16), wh,
                  preferred_element_type=jnp.float32) + bh
    # Kernel stores bf16 logits; round the reference the same way.
    out = out.astype(jnp.bfloat16).astype(jnp.float32)
    return out[:, :H].reshape(B, N, -1)


if __name__ == "__main__":
    # Small, deterministic problem sizes.  num_proposal deliberately not a
    # multiple of 128 to exercise the lane-padding path.
    B = 2
    seed_feat_dim = 128       # C
    num_proposal = 200        # N -> padded to 256 inside the wrapper
    num_heading_bin = 4
    num_size_cluster = 4
    num_class = 8

    key = jax.random.PRNGKey(0)
    k_feat, k_xyz, k_msa, k_params = jax.random.split(key, 4)

    features = jax.random.normal(k_feat, (B, seed_feat_dim, num_proposal),
                                 jnp.float32)
    base_xyz = jax.random.normal(k_xyz, (B, num_proposal, 3), jnp.float32)
    mean_size_arr = jnp.abs(
        jax.random.normal(k_msa, (num_size_cluster, 3), jnp.float32)) + 0.5

    params, heads = _init_params(k_params, seed_feat_dim, num_heading_bin,
                                 num_size_cluster, num_class)
    # One-time weight prep (BN fold, head concat, lane pad, bf16 cast).
    prepared, head_slices, H = _prepare_weights(params, heads)
    forward = make_predict_head_forward(head_slices, num_heading_bin,
                                        num_size_cluster)

    (center, pred_size), end_points = forward(features, base_xyz, *prepared,
                                              mean_size_arr)
    jax.block_until_ready((center, pred_size))

    # Sanity check the Pallas-computed head logits against pure JAX with the
    # same bf16-operand / f32-accum / bf16-store numerics.  Note:
    # size_residuals_normalized IS the raw head output (no mean-size scaling),
    # so it is compared directly.
    ref = _reference_heads(features, *prepared, H)
    got = jnp.concatenate(
        [end_points["objectness_scores"],
         end_points["center"] - base_xyz,
         end_points["heading_scores"],
         end_points["heading_residuals_normalized"],
         end_points["size_scores"],
         end_points["size_residuals_normalized"].reshape(B, num_proposal, -1),
         end_points["sem_cls_scores"]], axis=-1)
    assert got.shape == ref.shape
    assert jnp.allclose(got, ref, atol=5e-3, rtol=5e-3)
    assert center.shape == (B, num_proposal, 3)
    assert pred_size.shape == (B, num_proposal, 3)

    print("KERNEL_OK")
</pallas_src>

<mosaic_0001>
module attributes {stable_mosaic.version = 11 : i64} {
  func.func @_predict_head_kernel(%arg0: i32, %arg1: i32, %arg2: memref<1x128x256xf32, #tpu.memory_space<vmem>>, %arg3: memref<128x128xbf16, #tpu.memory_space<vmem>>, %arg4: memref<1x128xf32, #tpu.memory_space<vmem>>, %arg5: memref<128x128xbf16, #tpu.memory_space<vmem>>, %arg6: memref<1x128xf32, #tpu.memory_space<vmem>>, %arg7: memref<128x128xbf16, #tpu.memory_space<vmem>>, %arg8: memref<1x128xf32, #tpu.memory_space<vmem>>, %arg9: memref<1x256x128xbf16, #tpu.memory_space<vmem>>) attributes {dimension_semantics = [#tpu.dimension_semantics<parallel>, #tpu.dimension_semantics<parallel>], iteration_bounds = array<i64: 2, 1>, scalar_prefetch = 0 : i64, scratch_operands = 0 : i64, tpu.core_type = #tpu.core_type<tc>, window_params = [{transform_indices = @transform_0, window_bounds = array<i64: 1, 128, 256>}, {pipeline_mode = #tpu.pipeline_mode<synchronous>, transform_indices = @transform_1, window_bounds = array<i64: 128, 128>}, {pipeline_mode = #tpu.pipeline_mode<synchronous>, transform_indices = @transform_2, window_bounds = array<i64: 1, 128>}, {pipeline_mode = #tpu.pipeline_mode<synchronous>, transform_indices = @transform_3, window_bounds = array<i64: 128, 128>}, {pipeline_mode = #tpu.pipeline_mode<synchronous>, transform_indices = @transform_4, window_bounds = array<i64: 1, 128>}, {pipeline_mode = #tpu.pipeline_mode<synchronous>, transform_indices = @transform_5, window_bounds = array<i64: 128, 128>}, {pipeline_mode = #tpu.pipeline_mode<synchronous>, transform_indices = @transform_6, window_bounds = array<i64: 1, 128>}, {transform_indices = @transform_7, window_bounds = array<i64: 1, 256, 128>}]} {
    %c0 = arith.constant 0 : index
    %c0_0 = arith.constant 0 : index
    %c0_1 = arith.constant 0 : index
    %0 = vector.load %arg2[%c0, %c0_0, %c0_1] : memref<1x128x256xf32, #tpu.memory_space<vmem>>, vector<1x128x256xf32>
    %1 = vector.shape_cast %0 : vector<1x128x256xf32> to vector<128x256xf32>
    %2 = arith.truncf %1 : vector<128x256xf32> to vector<128x256xbf16>
    %c0_2 = arith.constant 0 : index
    %c0_3 = arith.constant 0 : index
    %3 = vector.load %arg3[%c0_2, %c0_3] : memref<128x128xbf16, #tpu.memory_space<vmem>>, vector<128x128xbf16>
    %cst = arith.constant dense<0.000000e+00> : vector<256x128xf32>
    %4 = tpu.matmul %2, %3, %cst {dimension_numbers = #tpu.dot_dimension_numbers<[0], [0], [1], [1], [0, 1, 1, 1], [], []>} : vector<128x256xbf16>, vector<128x128xbf16>, vector<256x128xf32> -> vector<256x128xf32>
    %c0_4 = arith.constant 0 : index
    %c0_5 = arith.constant 0 : index
    %5 = vector.load %arg4[%c0_4, %c0_5] : memref<1x128xf32, #tpu.memory_space<vmem>>, vector<1x128xf32>
    %6 = vector.broadcast %5 : vector<1x128xf32> to vector<256x128xf32>
    %7 = arith.addf %4, %6 : vector<256x128xf32>
    %cst_6 = arith.constant 0.000000e+00 : f32
    %8 = vector.broadcast %cst_6 : f32 to vector<256x128xf32>
    %9 = arith.maximumf %7, %8 : vector<256x128xf32>
    %10 = arith.truncf %9 : vector<256x128xf32> to vector<256x128xbf16>
    %c0_7 = arith.constant 0 : index
    %c0_8 = arith.constant 0 : index
    %11 = vector.load %arg5[%c0_7, %c0_8] : memref<128x128xbf16, #tpu.memory_space<vmem>>, vector<128x128xbf16>
    %cst_9 = arith.constant dense<0.000000e+00> : vector<256x128xf32>
    %12 = tpu.matmul %10, %11, %cst_9 {dimension_numbers = #tpu.dot_dimension_numbers<[1], [0], [0], [1], [0, 0, 1, 1], [], []>} : vector<256x128xbf16>, vector<128x128xbf16>, vector<256x128xf32> -> vector<256x128xf32>
    %c0_10 = arith.constant 0 : index
    %c0_11 = arith.constant 0 : index
    %13 = vector.load %arg6[%c0_10, %c0_11] : memref<1x128xf32, #tpu.memory_space<vmem>>, vector<1x128xf32>
    %14 = vector.broadcast %13 : vector<1x128xf32> to vector<256x128xf32>
    %15 = arith.addf %12, %14 : vector<256x128xf32>
    %cst_12 = arith.constant 0.000000e+00 : f32
    %16 = vector.broadcast %cst_12 : f32 to vector<256x128xf32>
    %17 = arith.maximumf %15, %16 : vector<256x128xf32>
    %18 = arith.truncf %17 : vector<256x128xf32> to vector<256x128xbf16>
    %c0_13 = arith.constant 0 : index
    %c0_14 = arith.constant 0 : index
    %19 = vector.load %arg7[%c0_13, %c0_14] : memref<128x128xbf16, #tpu.memory_space<vmem>>, vector<128x128xbf16>
    %cst_15 = arith.constant dense<0.000000e+00> : vector<256x128xf32>
    %20 = tpu.matmul %18, %19, %cst_15 {dimension_numbers = #tpu.dot_dimension_numbers<[1], [0], [0], [1], [0, 0, 1, 1], [], []>} : vector<256x128xbf16>, vector<128x128xbf16>, vector<256x128xf32> -> vector<256x128xf32>
    %c0_16 = arith.constant 0 : index
    %c0_17 = arith.constant 0 : index
    %21 = vector.load %arg8[%c0_16, %c0_17] : memref<1x128xf32, #tpu.memory_space<vmem>>, vector<1x128xf32>
    %22 = vector.broadcast %21 : vector<1x128xf32> to vector<256x128xf32>
    %23 = arith.addf %20, %22 : vector<256x128xf32>
    %24 = arith.truncf %23 : vector<256x128xf32> to vector<256x128xbf16>
    %c0_18 = arith.constant 0 : index
    %c0_19 = arith.constant 0 : index
    %c0_20 = arith.constant 0 : index
    %25 = vector.load %arg9[%c0_18, %c0_19, %c0_20] : memref<1x256x128xbf16, #tpu.memory_space<vmem>>, vector<1x256x128xbf16>
    %26 = vector.shape_cast %25 : vector<1x256x128xbf16> to vector<256x128xbf16>
    %27 = vector.shape_cast %24 : vector<256x128xbf16> to vector<1x256x128xbf16>
    tpu.vector_store %arg9[%c0_18, %c0_19, %c0_20], %27 {strides = array<i32>} : memref<1x256x128xbf16, #tpu.memory_space<vmem>>, vector<1x256x128xbf16>,
    return
  }
  func.func @transform_0(%arg0: i32, %arg1: i32) -> (i32, i32, i32) {
    %c0_i32 = arith.constant 0 : i32
    %c0_i32_0 = arith.constant 0 : i32
    return %arg0, %c0_i32, %arg1 : i32, i32, i32
  }
  func.func @transform_1(%arg0: i32, %arg1: i32) -> (i32, i32) {
    %c0_i32 = arith.constant 0 : i32
    %c0_i32_0 = arith.constant 0 : i32
    %c0_i32_1 = arith.constant 0 : i32
    return %c0_i32, %c0_i32_0 : i32, i32
  }
  func.func @transform_2(%arg0: i32, %arg1: i32) -> (i32, i32) {
    %c0_i32 = arith.constant 0 : i32
    %c0_i32_0 = arith.constant 0 : i32
    %c0_i32_1 = arith.constant 0 : i32
    return %c0_i32, %c0_i32_0 : i32, i32
  }
  func.func @transform_3(%arg0: i32, %arg1: i32) -> (i32, i32) {
    %c0_i32 = arith.constant 0 : i32
    %c0_i32_0 = arith.constant 0 : i32
    %c0_i32_1 = arith.constant 0 : i32
    return %c0_i32, %c0_i32_0 : i32, i32
  }
  func.func @transform_4(%arg0: i32, %arg1: i32) -> (i32, i32) {
    %c0_i32 = arith.constant 0 : i32
    %c0_i32_0 = arith.constant 0 : i32
    %c0_i32_1 = arith.constant 0 : i32
    return %c0_i32, %c0_i32_0 : i32, i32
  }
  func.func @transform_5(%arg0: i32, %arg1: i32) -> (i32, i32) {
    %c0_i32 = arith.constant 0 : i32
    %c0_i32_0 = arith.constant 0 : i32
    %c0_i32_1 = arith.constant 0 : i32
    return %c0_i32, %c0_i32_0 : i32, i32
  }
  func.func @transform_6(%arg0: i32, %arg1: i32) -> (i32, i32) {
    %c0_i32 = arith.constant 0 : i32
    %c0_i32_0 = arith.constant 0 : i32
    %c0_i32_1 = arith.constant 0 : i32
    return %c0_i32, %c0_i32_0 : i32, i32
  }
  func.func @transform_7(%arg0: i32, %arg1: i32) -> (i32, i32, i32) {
    %c0_i32 = arith.constant 0 : i32
    %c0_i32_0 = arith.constant 0 : i32
    return %arg0, %arg1, %c0_i32 : i32, i32, i32
  }
}

</mosaic_0001>

<llo_original>
// kernel: forward.1
$region0: #{forward.1}
  #allocation0 [shape = 'u32[]', space=smem, size = 0x4, offset = 0x4, fixed_abs, tag = 'smem constant byte address 0x4 - core index']
  #allocation1 [shape = 'u32[144,128]{1,0:T(1,128)}', space=vmem, size = 0x12000, scoped, tag = 'internal scratch']
  %s0 = inlined_call_operand.vmem [shape: f32[2,128,256], index: 0, kind: input, shape index: {}]
  %s1 = inlined_call_operand.vmem [shape: bf16[128,128], index: 1, kind: input, shape index: {}]
  %s2 = inlined_call_operand.vmem [shape: f32[1,128], index: 2, kind: input, shape index: {}]
  %s3 = inlined_call_operand.vmem [shape: bf16[128,128], index: 3, kind: input, shape index: {}]
  %s4 = inlined_call_operand.vmem [shape: f32[1,128], index: 4, kind: input, shape index: {}]
  %s5 = inlined_call_operand.vmem [shape: bf16[128,128], index: 5, kind: input, shape index: {}]
  %s6 = inlined_call_operand.vmem [shape: f32[1,128], index: 6, kind: input, shape index: {}]
  %s7 = inlined_call_operand.vmem [shape: bf16[2,256,128], index: 7, kind: output, shape index: {}]
  %s8 = sld [smem:[#allocation0]]
  $region61: #{forward.1} parent=0
    _
  %s10 = ssub.s32 1, %s8
  %s11 = scalar_select 0, %s10, %s8
  loop: start=0, step=1, limit=4
  $region2: #{forward.1} parent=0 // loop_pre_header
    _
  $region3: #{forward.1} parent=0 // loop_header
    %s13 = sphi 0, %s17
    %p14 = scmp.ge.s32.totalorder %s13, 4
    %s20 = sphi 0, %s32
    %s21 = sphi 0, %s28
    %s22 = sphi 0, %s20
    %s23 = sphi 0, %s21
    %s24 = sphi 0, %s22
    %s25 = sphi 0, %s23
    %s37 = sphi 0, %s39
    %s40 = sphi 0, %s37
    %s41 = sphi 0, %s40
    %s57 = sphi 0, %s41
    %s61 = sphi 0, %s61
    %s63 = sphi 0, %s61
    %s64 = sphi 0, %s63
    %s78 = sphi 0, %s64
    %s82 = sphi 0, %s82
    %s84 = sphi 0, %s82
    %s85 = sphi 0, %s84
    %s99 = sphi 0, %s85
    %s103 = sphi 0, %s103
    %s105 = sphi 0, %s103
    %s106 = sphi 0, %s105
    %s120 = sphi 0, %s106
    %s124 = sphi 0, %s124
    %s126 = sphi 0, %s124
    %s127 = sphi 0, %s126
    %s141 = sphi 0, %s127
    %s145 = sphi 0, %s145
    %s147 = sphi 0, %s145
    %s148 = sphi 0, %s147
    %s162 = sphi 0, %s148
    %s166 = sphi 0, %s166
    %s168 = sphi 0, %s166
    %s169 = sphi 0, %s168
    %s183 = sphi 0, %s169
    %s191 = sphi 0, %s193
    %s194 = sphi 0, %s191
    %s195 = sphi 0, %s194
    %s211 = sphi 0, %s195
  $region4: #{forward.1} parent=0 // loop_header_branch
    %16 = sbr.rel (%p14) target = $region8
  $region5: #{forward.1} parent=0 // loop_body
    %s18 = ssub.s32 %s13, 1
    %s19 = ssub.s32 %s13, 2
    %s26 = sadd.s32 1, %s21
    %p27 = scmp.ge.s32.totalorder %s26, 1
    %s28 = scalar_select %p27, 0, %s26
    %s29 = sadd.s32 1, %s20
    %s30 = scalar_select %p27, %s29, %s20
    %p31 = scmp.ge.s32.totalorder %s30, 2
    %s32 = scalar_select %p31, 0, %s30
    %s33 = ssub.s32 %s20, %s32
    %s34 = ssub.s32 %s21, %s28
    %s35 = sor.u32 %s33, %s34
    %p36 = scmp.eq.s32.totalorder %s35, 0
    %s38 = sadd.s32 %s37, 1
    %s39 = scalar_select %p36, %s37, %s38
    %p42 = pneg %p36
    %p43 = scmp.eq.s32.totalorder %s13, 1
    %p44 = por %p42, %p43
    %p45 = scmp.ne.s32.totalorder %s37, %s40
    %p46 = scmp.eq.s32.totalorder %s13, 0
    %p47 = por %p45, %p46
    %p48 = scmp.ne.s32.totalorder %s37, %s40
    %p49 = scmp.eq.s32.totalorder %s18, 1
    %p50 = por %p48, %p49
    %p51 = scmp.ne.s32.totalorder %s40, %s41
    %p52 = scmp.eq.s32.totalorder %s18, 0
    %p53 = por %p51, %p52
    %p54 = scmp.ne.s32.totalorder %s40, %s41
    %p55 = scmp.eq.s32.totalorder %s19, 1
    %p56 = por %p54, %p55
    %p58 = scmp.ne.s32.totalorder %s41, %s57
    %p59 = scmp.eq.s32.totalorder %s19, 0
    %p60 = por %p58, %p59
    %s62 = sadd.s32 %s61, 1
    %p65 = scmp.eq.s32.totalorder %s13, 1
    %p66 = scmp.ne.s32.totalorder %s61, %s63
    %p67 = scmp.eq.s32.totalorder %s13, 0
    %p68 = por %p66, %p67
    %p69 = scmp.ne.s32.totalorder %s61, %s63
    %p70 = scmp.eq.s32.totalorder %s18, 1
    %p71 = por %p69, %p70
    %p72 = scmp.ne.s32.totalorder %s63, %s64
    %p73 = scmp.eq.s32.totalorder %s18, 0
    %p74 = por %p72, %p73
    %p75 = scmp.ne.s32.totalorder %s63, %s64
    %p76 = scmp.eq.s32.totalorder %s19, 1
    %p77 = por %p75, %p76
    %p79 = scmp.ne.s32.totalorder %s64, %s78
    %p80 = scmp.eq.s32.totalorder %s19, 0
    %p81 = por %p79, %p80
    %s83 = sadd.s32 %s82, 1
    %p86 = scmp.eq.s32.totalorder %s13, 1
    %p87 = scmp.ne.s32.totalorder %s82, %s84
    %p88 = scmp.eq.s32.totalorder %s13, 0
    %p89 = por %p87, %p88
    %p90 = scmp.ne.s32.totalorder %s82, %s84
    %p91 = scmp.eq.s32.totalorder %s18, 1
    %p92 = por %p90, %p91
    %p93 = scmp.ne.s32.totalorder %s84, %s85
    %p94 = scmp.eq.s32.totalorder %s18, 0
    %p95 = por %p93, %p94
    %p96 = scmp.ne.s32.totalorder %s84, %s85
    %p97 = scmp.eq.s32.totalorder %s19, 1
    %p98 = por %p96, %p97
    %p100 = scmp.ne.s32.totalorder %s85, %s99
    %p101 = scmp.eq.s32.totalorder %s19, 0
    %p102 = por %p100, %p101
    %s104 = sadd.s32 %s103, 1
    %p107 = scmp.eq.s32.totalorder %s13, 1
    %p108 = scmp.ne.s32.totalorder %s103, %s105
    %p109 = scmp.eq.s32.totalorder %s13, 0
    %p110 = por %p108, %p109
    %p111 = scmp.ne.s32.totalorder %s103, %s105
    %p112 = scmp.eq.s32.totalorder %s18, 1
    %p113 = por %p111, %p112
    %p114 = scmp.ne.s32.totalorder %s105, %s106
    %p115 = scmp.eq.s32.totalorder %s18, 0
    %p116 = por %p114, %p115
    %p117 = scmp.ne.s32.totalorder %s105, %s106
    %p118 = scmp.eq.s32.totalorder %s19, 1
    %p119 = por %p117, %p118
    %p121 = scmp.ne.s32.totalorder %s106, %s120
    %p122 = scmp.eq.s32.totalorder %s19, 0
    %p123 = por %p121, %p122
    %s125 = sadd.s32 %s124, 1
    %p128 = scmp.eq.s32.totalorder %s13, 1
    %p129 = scmp.ne.s32.totalorder %s124, %s126
    %p130 = scmp.eq.s32.totalorder %s13, 0
    %p131 = por %p129, %p130
    %p132 = scmp.ne.s32.totalorder %s124, %s126
    %p133 = scmp.eq.s32.totalorder %s18, 1
    %p134 = por %p132, %p133
    %p135 = scmp.ne.s32.totalorder %s126, %s127
    %p136 = scmp.eq.s32.totalorder %s18, 0
    %p137 = por %p135, %p136
    %p138 = scmp.ne.s32.totalorder %s126, %s127
    %p139 = scmp.eq.s32.totalorder %s19, 1
    %p140 = por %p138, %p139
    %p142 = scmp.ne.s32.totalorder %s127, %s141
    %p143 = scmp.eq.s32.totalorder %s19, 0
    %p144 = por %p142, %p143
    %s146 = sadd.s32 %s145, 1
    %p149 = scmp.eq.s32.totalorder %s13, 1
    %p150 = scmp.ne.s32.totalorder %s145, %s147
    %p151 = scmp.eq.s32.totalorder %s13, 0
    %p152 = por %p150, %p151
    %p153 = scmp.ne.s32.totalorder %s145, %s147
    %p154 = scmp.eq.s32.totalorder %s18, 1
    %p155 = por %p153, %p154
    %p156 = scmp.ne.s32.totalorder %s147, %s148
    %p157 = scmp.eq.s32.totalorder %s18, 0
    %p158 = por %p156, %p157
    %p159 = scmp.ne.s32.totalorder %s147, %s148
    %p160 = scmp.eq.s32.totalorder %s19, 1
    %p161 = por %p159, %p160
    %p163 = scmp.ne.s32.totalorder %s148, %s162
    %p164 = scmp.eq.s32.totalorder %s19, 0
    %p165 = por %p163, %p164
    %s167 = sadd.s32 %s166, 1
    %p170 = scmp.eq.s32.totalorder %s13, 1
    %p171 = scmp.ne.s32.totalorder %s166, %s168
    %p172 = scmp.eq.s32.totalorder %s13, 0
    %p173 = por %p171, %p172
    %p174 = scmp.ne.s32.totalorder %s166, %s168
    %p175 = scmp.eq.s32.totalorder %s18, 1
    %p176 = por %p174, %p175
    %p177 = scmp.ne.s32.totalorder %s168, %s169
    %p178 = scmp.eq.s32.totalorder %s18, 0
    %p179 = por %p177, %p178
    %p180 = scmp.ne.s32.totalorder %s168, %s169
    %p181 = scmp.eq.s32.totalorder %s19, 1
    %p182 = por %p180, %p181
    %p184 = scmp.ne.s32.totalorder %s169, %s183
    %p185 = scmp.eq.s32.totalorder %s19, 0
    %p186 = por %p184, %p185
    %s187 = ssub.s32 %s20, %s32
    %s188 = ssub.s32 %s21, %s28
    %s189 = sor.u32 %s187, %s188
    %p190 = scmp.eq.s32.totalorder %s189, 0
    %s192 = sadd.s32 %s191, 1
    %s193 = scalar_select %p190, %s191, %s192
    %p196 = pneg %p190
    %p197 = scmp.eq.s32.totalorder %s13, 1
    %p198 = por %p196, %p197
    %p199 = scmp.ne.s32.totalorder %s191, %s194
    %p200 = scmp.eq.s32.totalorder %s13, 0
    %p201 = por %p199, %p200
    %p202 = scmp.ne.s32.totalorder %s191, %s194
    %p203 = scmp.eq.s32.totalorder %s18, 1
    %p204 = por %p202, %p203
    %p205 = scmp.ne.s32.totalorder %s194, %s195
    %p206 = scmp.eq.s32.totalorder %s18, 0
    %p207 = por %p205, %p206
    %p208 = scmp.ne.s32.totalorder %s194, %s195
    %p209 = scmp.eq.s32.totalorder %s19, 1
    %p210 = por %p208, %p209
    %p212 = scmp.ne.s32.totalorder %s195, %s211
    %p213 = scmp.eq.s32.totalorder %s19, 0
    %p214 = por %p212, %p213
    %p215 = scmp.le.s32.totalorder 1, %s13
    %p216 = scmp.lt.s32.totalorder %s13, 3
    %p217 = pnand %p215, %p216
    %p218 = pneg %p217
    // Predicated region
    $region9: #{forward.1} parent=5 // pred_check
      _
    $region10: #{forward.1} parent=5 // pred_check_branch
      %220 = sbr.rel (%p217) target = $region12
    $region11: #{forward.1} parent=5 // pred_region
      %s221 = ssub.s32 %s13, 1
      // Predicated region
      $region13: #{forward.1} parent=11 // pred_check
        %p222 = pneg %p74
      $region14: #{forward.1} parent=11 // pred_check_branch
        %224 = sbr.rel (%p222) target = $region16
      $region15: #{forward.1} parent=11 // pred_region
        _
      $region16: #{forward.1} parent=11 // pred_fallthru
        _
      // Predicated region
      $region17: #{forward.1} parent=11 // pred_check
        %p225 = pneg %p95
      $region18: #{forward.1} parent=11 // pred_check_branch
        %227 = sbr.rel (%p225) target = $region20
      $region19: #{forward.1} parent=11 // pred_region
        _
      $region20: #{forward.1} parent=11 // pred_fallthru
        _
      // Predicated region
      $region21: #{forward.1} parent=11 // pred_check
        %p228 = pneg %p116
      $region22: #{forward.1} parent=11 // pred_check_branch
        %230 = sbr.rel (%p228) target = $region24
      $region23: #{forward.1} parent=11 // pred_region
        _
      $region24: #{forward.1} parent=11 // pred_fallthru
        _
      // Predicated region
      $region25: #{forward.1} parent=11 // pred_check
        %p231 = pneg %p137
      $region26: #{forward.1} parent=11 // pred_check_branch
        %233 = sbr.rel (%p231) target = $region28
      $region27: #{forward.1} parent=11 // pred_region
        _
      $region28: #{forward.1} parent=11 // pred_fallthru
        _
      // Predicated region
      $region29: #{forward.1} parent=11 // pred_check
        %p234 = pneg %p158
      $region30: #{forward.1} parent=11 // pred_check_branch
        %236 = sbr.rel (%p234) target = $region32
      $region31: #{forward.1} parent=11 // pred_region
        _
      $region32: #{forward.1} parent=11 // pred_fallthru
        _
      // Predicated region
      $region33: #{forward.1} parent=11 // pred_check
        %p237 = pneg %p179
      $region34: #{forward.1} parent=11 // pred_check_branch
        %239 = sbr.rel (%p237) target = $region36
      $region35: #{forward.1} parent=11 // pred_region
        _
      $region36: #{forward.1} parent=11 // pred_fallthru
        _
    $region12: #{forward.1} parent=5 // pred_fallthru
      _
    %p240 = scmp.lt.s32.totalorder %s13, 2
    // Predicated region
    $region37: #{forward.1} parent=5 // pred_check
      %p241 = pneg %p240
    $region38: #{forward.1} parent=5 // pred_check_branch
      %243 = sbr.rel (%p241) target = $region40
    $region39: #{forward.1} parent=5 // pred_region
      // Predicated region
      $region41: #{forward.1} parent=39 // pred_check
        %p244 = pneg %p47
      $region42: #{forward.1} parent=39 // pred_check_branch
        %246 = sbr.rel (%p244) target = $region44
      $region43: #{forward.1} parent=39 // pred_region
        %s247 = smul.u32 2, %s21
        %p248 = scmp.lt.s32.totalorder %s20, 1
        %s249 = scalar_select %p248, %s20, 1
        %p250 = scmp.lt.s32.totalorder %s247, 1
        %s251 = scalar_select %p250, %s247, 1
        %s252 = smul.addr %s249, 32
        %s253 = sadd.s32 %s251, %s252
        %s254 = smul.addr %s253, 8
        %s255 = scalar_lea.vmem %s0, %s254
        %s256 = smul.u32 2, %s21
      $region44: #{forward.1} parent=39 // pred_fallthru
        _
    $region40: #{forward.1} parent=5 // pred_fallthru
      _
    %p257 = scmp.le.s32.totalorder 1, %s13
    %p258 = scmp.lt.s32.totalorder %s13, 3
    %p259 = pnand %p257, %p258
    %p260 = pneg %p259
    // Predicated region
    $region45: #{forward.1} parent=5 // pred_check
      _
    $region46: #{forward.1} parent=5 // pred_check_branch
      %262 = sbr.rel (%p259) target = $region48
    $region47: #{forward.1} parent=5 // pred_region
      %s263 = ssub.s32 %s13, 1
      %s264 = smul.u32 2, %s23
      %p265 = scmp.lt.s32.totalorder %s22, 1
      %s266 = scalar_select %p265, %s22, 1
      %p267 = scmp.lt.s32.totalorder %s264, 1
      %s268 = scalar_select %p267, %s264, 1
      %s269 = smul.addr %s266, 32
      %s270 = sadd.s32 %s268, %s269
      %s271 = smul.addr %s270, 8
      %s272 = scalar_lea.vmem %s0, %s271
      %p273 = pneg %p53
      %p274 = pneg %p50
      %p275 = pneg %p74
      %p276 = pneg %p71
      %p277 = pneg %p95
      %p278 = pneg %p92
      %p279 = pneg %p116
      %p280 = pneg %p113
      %p281 = pneg %p137
      %p282 = pneg %p134
      %p283 = pneg %p158
      %p284 = pneg %p155
      %p285 = pneg %p179
      %p286 = pneg %p176
      %p287 = pneg %p207
      %p288 = pneg %p204
      %s289 = smul.u32 32, %s23
      %p290 = scmp.lt.s32.totalorder %s22, 1
      %s291 = scalar_select %p290, %s22, 1
      %p292 = scmp.lt.s32.totalorder %s289, 31
      %s293 = scalar_select %p292, %s289, 31
      %s294 = smul.addr %s291, 32
      %s295 = sadd.s32 %s293, %s294
      %s296 = smul.addr %s295, 4
      %s297 = scalar_lea.vmem %s7, %s296
      %s298 = smul.u32 2, %s23
      %p299 = scmp.lt.s32.totalorder %s22, 1
      %s300 = scalar_select %p299, %s22, 1
      %p301 = scmp.lt.s32.totalorder %s298, 1
      %s302 = scalar_select %p301, %s298, 1
      %s303 = smul.addr %s300, 32
      %s304 = sadd.s32 %s302, %s303
      %s305 = smul.addr %s304, 8
      %s306 = scalar_lea.vmem %s0, %s305
      %s307 = smul.u32 2, %s23
      %s308 = smul.u32 32, %s23
      %p309 = scmp.lt.s32.totalorder %s22, 1
      %s310 = scalar_select %p309, %s22, 1
      %p311 = scmp.lt.s32.totalorder %s308, 31
      %s312 = scalar_select %p311, %s308, 31
      %s313 = smul.addr %s310, 32
      %s314 = sadd.s32 %s312, %s313
      %s315 = smul.addr %s314, 4
      %s316 = scalar_lea.vmem %s7, %s315
      %s317 = smul.u32 32, %s23
      %v319 = vld [vmem:[%s306] sm:$0xff]
      %v320 = vld [vmem:[%s306 + $0x8] sm:$0xff]
      %v321 = vld [vmem:[%s306 + $0x10] sm:$0xff]
      %v322 = vld [vmem:[%s306 + $0x18] sm:$0xff]
      %v323 = vld [vmem:[%s306 + $0x20] sm:$0xff]
      %v324 = vld [vmem:[%s306 + $0x28] sm:$0xff]
      %v325 = vld [vmem:[%s306 + $0x30] sm:$0xff]
      %v326 = vld [vmem:[%s306 + $0x38] sm:$0xff]
      %v327 = vld [vmem:[%s306 + $0x40] sm:$0xff]
      %v328 = vld [vmem:[%s306 + $0x48] sm:$0xff]
      %v329 = vld [vmem:[%s306 + $0x50] sm:$0xff]
      %v330 = vld [vmem:[%s306 + $0x58] sm:$0xff]
      %v331 = vld [vmem:[%s306 + $0x60] sm:$0xff]
      %v332 = vld [vmem:[%s306 + $0x68] sm:$0xff]
      %v333 = vld [vmem:[%s306 + $0x70] sm:$0xff]
      %v334 = vld [vmem:[%s306 + $0x78] sm:$0xff]
      %v335 = vld [vmem:[%s306 + $0x80] sm:$0xff]
      %v336 = vld [vmem:[%s306 + $0x88] sm:$0xff]
      %v337 = vld [vmem:[%s306 + $0x90] sm:$0xff]
      %v338 = vld [vmem:[%s306 + $0x98] sm:$0xff]
      %v339 = vld [vmem:[%s306 + $0xa0] sm:$0xff]
      %v340 = vld [vmem:[%s306 + $0xa8] sm:$0xff]
      %v341 = vld [vmem:[%s306 + $0xb0] sm:$0xff]
      %v342 = vld [vmem:[%s306 + $0xb8] sm:$0xff]
      %v343 = vld [vmem:[%s306 + $0xc0] sm:$0xff]
      %v344 = vld [vmem:[%s306 + $0xc8] sm:$0xff]
      %v345 = vld [vmem:[%s306 + $0xd0] sm:$0xff]
      %v346 = vld [vmem:[%s306 + $0xd8] sm:$0xff]
      %v347 = vld [vmem:[%s306 + $0xe0] sm:$0xff]
      %v348 = vld [vmem:[%s306 + $0xe8] sm:$0xff]
      %v349 = vld [vmem:[%s306 + $0xf0] sm:$0xff]
      %v350 = vld [vmem:[%s306 + $0xf8] sm:$0xff]
      %v351 = vpack.c.bf16 %v321, %v319
      %v352 = vpack.c.bf16 %v322, %v320
      %v353 = vpack.c.bf16 %v325, %v323
      %v354 = vpack.c.bf16 %v326, %v324
      %v355 = vpack.c.bf16 %v329, %v327
      %v356 = vpack.c.bf16 %v330, %v328
      %v357 = vpack.c.bf16 %v333, %v331
      %v358 = vpack.c.bf16 %v334, %v332
      %v359 = vpack.c.bf16 %v337, %v335
      %v360 = vpack.c.bf16 %v338, %v336
      %v361 = vpack.c.bf16 %v341, %v339
      %v362 = vpack.c.bf16 %v342, %v340
      %v363 = vpack.c.bf16 %v345, %v343
      %v364 = vpack.c.bf16 %v346, %v344
      %v365 = vpack.c.bf16 %v349, %v347
      %v366 = vpack.c.bf16 %v350, %v348
      %v367 = vld [vmem:[%s1] sm:$0xf]
      %v368 = vld [vmem:[%s1 + $0x4] sm:$0xf]
      %v369 = vld [vmem:[%s1 + $0x8] sm:$0xf]
      %v370 = vld [vmem:[%s1 + $0xc] sm:$0xf]
      %v371 = vld [vmem:[%s1 + $0x10] sm:$0xf]
      %v372 = vld [vmem:[%s1 + $0x14] sm:$0xf]
      %v373 = vld [vmem:[%s1 + $0x18] sm:$0xf]
      %v374 = vld [vmem:[%s1 + $0x1c] sm:$0xf]
      %v375 = vld [vmem:[%s1 + $0x20] sm:$0xf]
      %v376 = vld [vmem:[%s1 + $0x24] sm:$0xf]
      %v377 = vld [vmem:[%s1 + $0x28] sm:$0xf]
      %v378 = vld [vmem:[%s1 + $0x2c] sm:$0xf]
      %v379 = vld [vmem:[%s1 + $0x30] sm:$0xf]
      %v380 = vld [vmem:[%s1 + $0x34] sm:$0xf]
      %v381 = vld [vmem:[%s1 + $0x38] sm:$0xf]
      %v382 = vld [vmem:[%s1 + $0x3c] sm:$0xf]
      %v383 = vld [vmem:[%s2] sm:$0x1]
      %v385 = vlaneseq
      %v386 = vshrl.u32 %v385, 7
      %v387 = vsub.s32 0, %v386
      %v388 = vrot.slane %v383, %v387
      %390 = vxpose.xlu0.c.b16.start [1/8] %v351, 128
      %391 = vxpose.xlu0.c.b16.cont [2/8] %v353, 128
      %392 = vxpose.xlu0.c.b16.cont [3/8] %v355, 128
      %393 = vxpose.xlu0.c.b16.cont [4/8] %v357, 128
      %394 = vxpose.xlu0.c.b16.cont [5/8] %v359, 128
      %395 = vxpose.xlu0.c.b16.cont [6/8] %v361, 128
      %396 = vxpose.xlu0.c.b16.cont [7/8] %v363, 128
      %397 = vxpose.xlu0.c.b16.end [8/8] %v365, 128
      %v398 = vpop.trf.xlu0
      %v399 = vpop.trf.xlu0
      %v400 = vpop.trf.xlu0
      %v401 = vpop.trf.xlu0
      %v402 = vpop.trf.xlu0
      %v403 = vpop.trf.xlu0
      %v404 = vpop.trf.xlu0
      %v405 = vpop.trf.xlu0
      %406 = vxpose.xlu0.c.b16.start [1/8] %v352, 128
      %407 = vxpose.xlu0.c.b16.cont [2/8] %v354, 128
      %408 = vxpose.xlu0.c.b16.cont [3/8] %v356, 128
      %409 = vxpose.xlu0.c.b16.cont [4/8] %v358, 128
      %410 = vxpose.xlu0.c.b16.cont [5/8] %v360, 128
      %411 = vxpose.xlu0.c.b16.cont [6/8] %v362, 128
      %412 = vxpose.xlu0.c.b16.cont [7/8] %v364, 128
      %413 = vxpose.xlu0.c.b16.end [8/8] %v366, 128
      %v414 = vpop.trf.xlu0
      %v415 = vpop.trf.xlu0
      %v416 = vpop.trf.xlu0
      %v417 = vpop.trf.xlu0
      %v418 = vpop.trf.xlu0
      %v419 = vpop.trf.xlu0
      %v420 = vpop.trf.xlu0
      %v421 = vpop.trf.xlu0
      %v438 = vunpack.c.l.b16 %v367
      %v439 = vunpack.c.l.b16 %v368
      %v440 = vunpack.c.l.b16 %v369
      %v441 = vunpack.c.l.b16 %v370
      %v442 = vunpack.c.l.b16 %v371
      %v443 = vunpack.c.l.b16 %v372
      %v444 = vunpack.c.l.b16 %v373
      %v445 = vunpack.c.l.b16 %v374
      %v446 = vunpack.c.l.b16 %v375
      %v447 = vunpack.c.l.b16 %v376
      %v448 = vunpack.c.l.b16 %v377
      %v449 = vunpack.c.l.b16 %v378
      %v450 = vunpack.c.l.b16 %v379
      %v451 = vunpack.c.l.b16 %v380
      %v452 = vunpack.c.l.b16 %v381
      %v453 = vunpack.c.l.b16 %v382
      %v454 = vpack.c.b16 %v439, %v438
      %v455 = vpack.c.b16 %v441, %v440
      %v456 = vpack.c.b16 %v443, %v442
      %v457 = vpack.c.b16 %v445, %v444
      %v458 = vpack.c.b16 %v447, %v446
      %v459 = vpack.c.b16 %v449, %v448
      %v460 = vpack.c.b16 %v451, %v450
      %v461 = vpack.c.b16 %v453, %v452
      %470 = vmatprep.subr.bf16.mxu0 0
      %471 = vmatpush1.bf16.msra.mxu0 %v461
      %472 = vmatprep.subr.bf16.mxu0 0
      %473 = vmatpush1.bf16.msra.mxu0 %v460
      %474 = vmatprep.subr.bf16.mxu0 0
      %475 = vmatpush1.bf16.msra.mxu0 %v459
      %476 = vmatprep.subr.bf16.mxu0 0
      %477 = vmatpush1.bf16.msra.mxu0 %v458
      %478 = vmatprep.subr.bf16.mxu0 0
      %479 = vmatpush1.bf16.msra.mxu0 %v457
      %480 = vmatprep.subr.bf16.mxu0 0
      %481 = vmatpush1.bf16.msra.mxu0 %v456
      %482 = vmatprep.subr.bf16.mxu0 0
      %483 = vmatpush1.bf16.msra.mxu0 %v455
      %484 = vmatprep.subr.bf16.mxu0 0
      %485 = vmatpush1.bf16.msra.mxu0 %v454
      %486 = vmatprep.subr.bf16.mxu0 0
      %487 = vmatpush2.bf16.msra.mxu0 0
      %488 = vmatprep.subr.bf16.mxu0 0
      %489 = vmatpush2.bf16.msra.mxu0 0
      %490 = vmatprep.subr.bf16.mxu0 0
      %491 = vmatpush2.bf16.msra.mxu0 0
      %492 = vmatprep.subr.bf16.mxu0 0
      %493 = vmatpush2.bf16.msra.mxu0 0
      %494 = vmatprep.subr.bf16.mxu0 0
      %495 = vmatpush2.bf16.msra.mxu0 0
      %496 = vmatprep.subr.bf16.mxu0 0
      %497 = vmatpush2.bf16.msra.mxu0 0
      %498 = vmatprep.subr.bf16.mxu0 0
      %499 = vmatpush2.bf16.msra.mxu0 0
      %500 = vmatprep.subr.bf16.mxu0 0
      %501 = vmatpush2.bf16.msra.mxu0 0
      %502 = vmatprep.mubr.bf16.mxu0 0
      %503 = vmatmul.mubr.bf16.gmra.mxu0 %v398
      %v504 = vpop.f32.mrf.mxu0
      %v505 = vadd.f32 %v388, %v504
      %v506 = vpop.f32.mrf.mxu0
      %v507 = vpop.f32.mrf.mxu0
      %v508 = vadd.f32 %v388, %v507
      %v509 = vpop.f32.mrf.mxu0
      %510 = vmatprep.mubr.bf16.mxu0 0
      %511 = vmatmul.mubr.bf16.gmra.mxu0 %v399
      %v512 = vpop.f32.mrf.mxu0
      %v513 = vadd.f32 %v388, %v512
      %v514 = vpop.f32.mrf.mxu0
      %v515 = vpop.f32.mrf.mxu0
      %v516 = vadd.f32 %v388, %v515
      %v517 = vpop.f32.mrf.mxu0
      %518 = vmatprep.mubr.bf16.mxu0 0
      %519 = vmatmul.mubr.bf16.gmra.mxu0 %v400
      %v520 = vpop.f32.mrf.mxu0
      %v521 = vadd.f32 %v388, %v520
      %v522 = vpop.f32.mrf.mxu0
      %v523 = vpop.f32.mrf.mxu0
      %v524 = vadd.f32 %v388, %v523
      %v525 = vpop.f32.mrf.mxu0
      %526 = vmatprep.mubr.bf16.mxu0 0
      %527 = vmatmul.mubr.bf16.gmra.mxu0 %v401
      %v528 = vpop.f32.mrf.mxu0
      %v529 = vadd.f32 %v388, %v528
      %v530 = vpop.f32.mrf.mxu0
      %v531 = vpop.f32.mrf.mxu0
      %v532 = vadd.f32 %v388, %v531
      %v533 = vpop.f32.mrf.mxu0
      %534 = vmatprep.mubr.bf16.mxu0 0
      %535 = vmatmul.mubr.bf16.gmra.mxu0 %v402
      %v536 = vpop.f32.mrf.mxu0
      %v537 = vadd.f32 %v388, %v536
      %v538 = vpop.f32.mrf.mxu0
      %v539 = vpop.f32.mrf.mxu0
      %v540 = vadd.f32 %v388, %v539
      %v541 = vpop.f32.mrf.mxu0
      %542 = vmatprep.mubr.bf16.mxu0 0
      %543 = vmatmul.mubr.bf16.gmra.mxu0 %v403
      %v544 = vpop.f32.mrf.mxu0
      %v545 = vadd.f32 %v388, %v544
      %v546 = vpop.f32.mrf.mxu0
      %v547 = vpop.f32.mrf.mxu0
      %v548 = vadd.f32 %v388, %v547
      %v549 = vpop.f32.mrf.mxu0
      %550 = vmatprep.mubr.bf16.mxu0 0
      %551 = vmatmul.mubr.bf16.gmra.mxu0 %v404
      %v552 = vpop.f32.mrf.mxu0
      %v553 = vadd.f32 %v388, %v552
      %v554 = vpop.f32.mrf.mxu0
      %v555 = vpop.f32.mrf.mxu0
      %v556 = vadd.f32 %v388, %v555
      %v557 = vpop.f32.mrf.mxu0
      %558 = vmatprep.mubr.bf16.mxu0 0
      %559 = vmatmul.mubr.bf16.gmra.mxu0 %v405
      %v560 = vpop.f32.mrf.mxu0
      %v561 = vadd.f32 %v388, %v560
      %v562 = vpop.f32.mrf.mxu0
      %v563 = vpop.f32.mrf.mxu0
      %v564 = vadd.f32 %v388, %v563
      %v565 = vpop.f32.mrf.mxu0
      %566 = vmatprep.mubr.bf16.mxu0 0
      %567 = vmatmul.mubr.bf16.gmra.mxu0 %v414
      %v568 = vpop.f32.mrf.mxu0
      %v569 = vadd.f32 %v388, %v568
      %v570 = vpop.f32.mrf.mxu0
      %v571 = vpop.f32.mrf.mxu0
      %v572 = vadd.f32 %v388, %v571
      %v573 = vpop.f32.mrf.mxu0
      %574 = vmatprep.mubr.bf16.mxu0 0
      %575 = vmatmul.mubr.bf16.gmra.mxu0 %v415
      %v576 = vpop.f32.mrf.mxu0
      %v577 = vadd.f32 %v388, %v576
      %v578 = vpop.f32.mrf.mxu0
      %v579 = vpop.f32.mrf.mxu0
      %v580 = vadd.f32 %v388, %v579
      %v581 = vpop.f32.mrf.mxu0
      %582 = vmatprep.mubr.bf16.mxu0 0
      %583 = vmatmul.mubr.bf16.gmra.mxu0 %v416
      %v584 = vpop.f32.mrf.mxu0
      %v585 = vadd.f32 %v388, %v584
      %v586 = vpop.f32.mrf.mxu0
      %v587 = vpop.f32.mrf.mxu0
      %v588 = vadd.f32 %v388, %v587
      %v589 = vpop.f32.mrf.mxu0
      %590 = vmatprep.mubr.bf16.mxu0 0
      %591 = vmatmul.mubr.bf16.gmra.mxu0 %v417
      %v592 = vpop.f32.mrf.mxu0
      %v593 = vadd.f32 %v388, %v592
      %v594 = vpop.f32.mrf.mxu0
      %v595 = vpop.f32.mrf.mxu0
      %v596 = vadd.f32 %v388, %v595
      %v597 = vpop.f32.mrf.mxu0
      %598 = vmatprep.mubr.bf16.mxu0 0
      %599 = vmatmul.mubr.bf16.gmra.mxu0 %v418
      %v600 = vpop.f32.mrf.mxu0
      %v601 = vadd.f32 %v388, %v600
      %v602 = vpop.f32.mrf.mxu0
      %v603 = vpop.f32.mrf.mxu0
      %v604 = vadd.f32 %v388, %v603
      %v605 = vpop.f32.mrf.mxu0
      %606 = vmatprep.mubr.bf16.mxu0 0
      %607 = vmatmul.mubr.bf16.gmra.mxu0 %v419
      %v608 = vpop.f32.mrf.mxu0
      %v609 = vadd.f32 %v388, %v608
      %v610 = vpop.f32.mrf.mxu0
      %v611 = vpop.f32.mrf.mxu0
      %v612 = vadd.f32 %v388, %v611
      %v613 = vpop.f32.mrf.mxu0
      %614 = vmatprep.mubr.bf16.mxu0 0
      %615 = vmatmul.mubr.bf16.gmra.mxu0 %v420
      %v616 = vpop.f32.mrf.mxu0
      %v617 = vadd.f32 %v388, %v616
      %v618 = vpop.f32.mrf.mxu0
      %v619 = vpop.f32.mrf.mxu0
      %v620 = vadd.f32 %v388, %v619
      %v621 = vpop.f32.mrf.mxu0
      %622 = vmatprep.mubr.bf16.mxu0 0
      %623 = vmatmul.mubr.bf16.gmra.mxu0 %v421
      %v624 = vpop.f32.mrf.mxu0
      %v625 = vadd.f32 %v388, %v624
      %v626 = vpop.f32.mrf.mxu0
      %v627 = vpop.f32.mrf.mxu0
      %v628 = vadd.f32 %v388, %v627
      %v629 = vpop.f32.mrf.mxu0
      %630 = vdwg.mxu0
      %v631 = vmax.f32 %v505, 0.0
      %v632 = vmax.f32 %v508, 0.0
      %v633 = vmax.f32 %v513, 0.0
      %v634 = vmax.f32 %v516, 0.0
      %v635 = vmax.f32 %v521, 0.0
      %v636 = vmax.f32 %v524, 0.0
      %v637 = vmax.f32 %v529, 0.0
      %v638 = vmax.f32 %v532, 0.0
      %v639 = vmax.f32 %v537, 0.0
      %v640 = vmax.f32 %v540, 0.0
      %v641 = vmax.f32 %v545, 0.0
      %v642 = vmax.f32 %v548, 0.0
      %v643 = vmax.f32 %v553, 0.0
      %v644 = vmax.f32 %v556, 0.0
      %v645 = vmax.f32 %v561, 0.0
      %v646 = vmax.f32 %v564, 0.0
      %v647 = vmax.f32 %v569, 0.0
      %v648 = vmax.f32 %v572, 0.0
      %v649 = vmax.f32 %v577, 0.0
      %v650 = vmax.f32 %v580, 0.0
      %v651 = vmax.f32 %v585, 0.0
      %v652 = vmax.f32 %v588, 0.0
      %v653 = vmax.f32 %v593, 0.0
      %v654 = vmax.f32 %v596, 0.0
      %v655 = vmax.f32 %v601, 0.0
      %v656 = vmax.f32 %v604, 0.0
      %v657 = vmax.f32 %v609, 0.0
      %v658 = vmax.f32 %v612, 0.0
      %v659 = vmax.f32 %v617, 0.0
      %v660 = vmax.f32 %v620, 0.0
      %v661 = vmax.f32 %v625, 0.0
      %v662 = vmax.f32 %v628, 0.0
      %v663 = vpack.c.bf16 %v632, %v631
      %v664 = vpack.c.bf16 %v634, %v633
      %v665 = vpack.c.bf16 %v636, %v635
      %v666 = vpack.c.bf16 %v638, %v637
      %v667 = vpack.c.bf16 %v640, %v639
      %v668 = vpack.c.bf16 %v642, %v641
      %v669 = vpack.c.bf16 %v644, %v643
      %v670 = vpack.c.bf16 %v646, %v645
      %v671 = vpack.c.bf16 %v648, %v647
      %v672 = vpack.c.bf16 %v650, %v649
      %v673 = vpack.c.bf16 %v652, %v651
      %v674 = vpack.c.bf16 %v654, %v653
      %v675 = vpack.c.bf16 %v656, %v655
      %v676 = vpack.c.bf16 %v658, %v657
      %v677 = vpack.c.bf16 %v660, %v659
      %v678 = vpack.c.bf16 %v662, %v661
      %v679 = vld [vmem:[%s3] sm:$0xf]
      %v680 = vld [vmem:[%s3 + $0x4] sm:$0xf]
      %v681 = vld [vmem:[%s3 + $0x8] sm:$0xf]
      %v682 = vld [vmem:[%s3 + $0xc] sm:$0xf]
      %v683 = vld [vmem:[%s3 + $0x10] sm:$0xf]
      %v684 = vld [vmem:[%s3 + $0x14] sm:$0xf]
      %v685 = vld [vmem:[%s3 + $0x18] sm:$0xf]
      %v686 = vld [vmem:[%s3 + $0x1c] sm:$0xf]
      %v687 = vld [vmem:[%s3 + $0x20] sm:$0xf]
      %v688 = vld [vmem:[%s3 + $0x24] sm:$0xf]
      %v689 = vld [vmem:[%s3 + $0x28] sm:$0xf]
      %v690 = vld [vmem:[%s3 + $0x2c] sm:$0xf]
      %v691 = vld [vmem:[%s3 + $0x30] sm:$0xf]
      %v692 = vld [vmem:[%s3 + $0x34] sm:$0xf]
      %v693 = vld [vmem:[%s3 + $0x38] sm:$0xf]
      %v694 = vld [vmem:[%s3 + $0x3c] sm:$0xf]
      %v695 = vld [vmem:[%s4] sm:$0x1]
      %v697 = vlaneseq
      %v698 = vshrl.u32 %v697, 7
      %v699 = vsub.s32 0, %v698
      %v700 = vrot.slane %v695, %v699
      %v718 = vunpack.c.l.b16 %v679
      %v719 = vunpack.c.l.b16 %v680
      %v720 = vunpack.c.l.b16 %v681
      %v721 = vunpack.c.l.b16 %v682
      %v722 = vunpack.c.l.b16 %v683
      %v723 = vunpack.c.l.b16 %v684
      %v724 = vunpack.c.l.b16 %v685
      %v725 = vunpack.c.l.b16 %v686
      %v726 = vunpack.c.l.b16 %v687
      %v727 = vunpack.c.l.b16 %v688
      %v728 = vunpack.c.l.b16 %v689
      %v729 = vunpack.c.l.b16 %v690
      %v730 = vunpack.c.l.b16 %v691
      %v731 = vunpack.c.l.b16 %v692
      %v732 = vunpack.c.l.b16 %v693
      %v733 = vunpack.c.l.b16 %v694
      %v734 = vpack.c.b16 %v719, %v718
      %v735 = vpack.c.b16 %v721, %v720
      %v736 = vpack.c.b16 %v723, %v722
      %v737 = vpack.c.b16 %v725, %v724
      %v738 = vpack.c.b16 %v727, %v726
      %v739 = vpack.c.b16 %v729, %v728
      %v740 = vpack.c.b16 %v731, %v730
      %v741 = vpack.c.b16 %v733, %v732
      %750 = vmatprep.subr.bf16.mxu0 0
      %751 = vmatpush1.bf16.msra.mxu0 %v741
      %752 = vmatprep.subr.bf16.mxu0 0
      %753 = vmatpush1.bf16.msra.mxu0 %v740
      %754 = vmatprep.subr.bf16.mxu0 0
      %755 = vmatpush1.bf16.msra.mxu0 %v739
      %756 = vmatprep.subr.bf16.mxu0 0
      %757 = vmatpush1.bf16.msra.mxu0 %v738
      %758 = vmatprep.subr.bf16.mxu0 0
      %759 = vmatpush1.bf16.msra.mxu0 %v737
      %760 = vmatprep.subr.bf16.mxu0 0
      %761 = vmatpush1.bf16.msra.mxu0 %v736
      %762 = vmatprep.subr.bf16.mxu0 0
      %763 = vmatpush1.bf16.msra.mxu0 %v735
      %764 = vmatprep.subr.bf16.mxu0 0
      %765 = vmatpush1.bf16.msra.mxu0 %v734
      %766 = vmatprep.subr.bf16.mxu0 0
      %767 = vmatpush2.bf16.msra.mxu0 0
      %768 = vmatprep.subr.bf16.mxu0 0
      %769 = vmatpush2.bf16.msra.mxu0 0
      %770 = vmatprep.subr.bf16.mxu0 0
      %771 = vmatpush2.bf16.msra.mxu0 0
      %772 = vmatprep.subr.bf16.mxu0 0
      %773 = vmatpush2.bf16.msra.mxu0 0
      %774 = vmatprep.subr.bf16.mxu0 0
      %775 = vmatpush2.bf16.msra.mxu0 0
      %776 = vmatprep.subr.bf16.mxu0 0
      %777 = vmatpush2.bf16.msra.mxu0 0
      %778 = vmatprep.subr.bf16.mxu0 0
      %779 = vmatpush2.bf16.msra.mxu0 0
      %780 = vmatprep.subr.bf16.mxu0 0
      %781 = vmatpush2.bf16.msra.mxu0 0
      %782 = vmatprep.mubr.bf16.mxu0 0
      %783 = vmatmul.mubr.bf16.gmra.mxu0 %v663
      %v784 = vpop.f32.mrf.mxu0
      %v785 = vadd.f32 %v700, %v784
      %v786 = vpop.f32.mrf.mxu0
      %v787 = vpop.f32.mrf.mxu0
      %v788 = vadd.f32 %v700, %v787
      %v789 = vpop.f32.mrf.mxu0
      %790 = vmatprep.mubr.bf16.mxu0 0
      %791 = vmatmul.mubr.bf16.gmra.mxu0 %v664
      %v792 = vpop.f32.mrf.mxu0
      %v793 = vadd.f32 %v700, %v792
      %v794 = vpop.f32.mrf.mxu0
      %v795 = vpop.f32.mrf.mxu0
      %v796 = vadd.f32 %v700, %v795
      %v797 = vpop.f32.mrf.mxu0
      %798 = vmatprep.mubr.bf16.mxu0 0
      %799 = vmatmul.mubr.bf16.gmra.mxu0 %v665
      %v800 = vpop.f32.mrf.mxu0
      %v801 = vadd.f32 %v700, %v800
      %v802 = vpop.f32.mrf.mxu0
      %v803 = vpop.f32.mrf.mxu0
      %v804 = vadd.f32 %v700, %v803
      %v805 = vpop.f32.mrf.mxu0
      %806 = vmatprep.mubr.bf16.mxu0 0
      %807 = vmatmul.mubr.bf16.gmra.mxu0 %v666
      %v808 = vpop.f32.mrf.mxu0
      %v809 = vadd.f32 %v700, %v808
      %v810 = vpop.f32.mrf.mxu0
      %v811 = vpop.f32.mrf.mxu0
      %v812 = vadd.f32 %v700, %v811
      %v813 = vpop.f32.mrf.mxu0
      %814 = vmatprep.mubr.bf16.mxu0 0
      %815 = vmatmul.mubr.bf16.gmra.mxu0 %v667
      %v816 = vpop.f32.mrf.mxu0
      %v817 = vadd.f32 %v700, %v816
      %v818 = vpop.f32.mrf.mxu0
      %v819 = vpop.f32.mrf.mxu0
      %v820 = vadd.f32 %v700, %v819
      %v821 = vpop.f32.mrf.mxu0
      %822 = vmatprep.mubr.bf16.mxu0 0
      %823 = vmatmul.mubr.bf16.gmra.mxu0 %v668
      %v824 = vpop.f32.mrf.mxu0
      %v825 = vadd.f32 %v700, %v824
      %v826 = vpop.f32.mrf.mxu0
      %v827 = vpop.f32.mrf.mxu0
      %v828 = vadd.f32 %v700, %v827
      %v829 = vpop.f32.mrf.mxu0
      %830 = vmatprep.mubr.bf16.mxu0 0
      %831 = vmatmul.mubr.bf16.gmra.mxu0 %v669
      %v832 = vpop.f32.mrf.mxu0
      %v833 = vadd.f32 %v700, %v832
      %v834 = vpop.f32.mrf.mxu0
      %v835 = vpop.f32.mrf.mxu0
      %v836 = vadd.f32 %v700, %v835
      %v837 = vpop.f32.mrf.mxu0
      %838 = vmatprep.mubr.bf16.mxu0 0
      %839 = vmatmul.mubr.bf16.gmra.mxu0 %v670
      %v840 = vpop.f32.mrf.mxu0
      %v841 = vadd.f32 %v700, %v840
      %v842 = vpop.f32.mrf.mxu0
      %v843 = vpop.f32.mrf.mxu0
      %v844 = vadd.f32 %v700, %v843
      %v845 = vpop.f32.mrf.mxu0
      %846 = vmatprep.mubr.bf16.mxu0 0
      %847 = vmatmul.mubr.bf16.gmra.mxu0 %v671
      %v848 = vpop.f32.mrf.mxu0
      %v849 = vadd.f32 %v700, %v848
      %v850 = vpop.f32.mrf.mxu0
      %v851 = vpop.f32.mrf.mxu0
      %v852 = vadd.f32 %v700, %v851
      %v853 = vpop.f32.mrf.mxu0
      %854 = vmatprep.mubr.bf16.mxu0 0
      %855 = vmatmul.mubr.bf16.gmra.mxu0 %v672
      %v856 = vpop.f32.mrf.mxu0
      %v857 = vadd.f32 %v700, %v856
      %v858 = vpop.f32.mrf.mxu0
      %v859 = vpop.f32.mrf.mxu0
      %v860 = vadd.f32 %v700, %v859
      %v861 = vpop.f32.mrf.mxu0
      %862 = vmatprep.mubr.bf16.mxu0 0
      %863 = vmatmul.mubr.bf16.gmra.mxu0 %v673
      %v864 = vpop.f32.mrf.mxu0
      %v865 = vadd.f32 %v700, %v864
      %v866 = vpop.f32.mrf.mxu0
      %v867 = vpop.f32.mrf.mxu0
      %v868 = vadd.f32 %v700, %v867
      %v869 = vpop.f32.mrf.mxu0
      %870 = vmatprep.mubr.bf16.mxu0 0
      %871 = vmatmul.mubr.bf16.gmra.mxu0 %v674
      %v872 = vpop.f32.mrf.mxu0
      %v873 = vadd.f32 %v700, %v872
      %v874 = vpop.f32.mrf.mxu0
      %v875 = vpop.f32.mrf.mxu0
      %v876 = vadd.f32 %v700, %v875
      %v877 = vpop.f32.mrf.mxu0
      %878 = vmatprep.mubr.bf16.mxu0 0
      %879 = vmatmul.mubr.bf16.gmra.mxu0 %v675
      %v880 = vpop.f32.mrf.mxu0
      %v881 = vadd.f32 %v700, %v880
      %v882 = vpop.f32.mrf.mxu0
      %v883 = vpop.f32.mrf.mxu0
      %v884 = vadd.f32 %v700, %v883
      %v885 = vpop.f32.mrf.mxu0
      %886 = vmatprep.mubr.bf16.mxu0 0
      %887 = vmatmul.mubr.bf16.gmra.mxu0 %v676
      %v888 = vpop.f32.mrf.mxu0
      %v889 = vadd.f32 %v700, %v888
      %v890 = vpop.f32.mrf.mxu0
      %v891 = vpop.f32.mrf.mxu0
      %v892 = vadd.f32 %v700, %v891
      %v893 = vpop.f32.mrf.mxu0
      %894 = vmatprep.mubr.bf16.mxu0 0
      %895 = vmatmul.mubr.bf16.gmra.mxu0 %v677
      %v896 = vpop.f32.mrf.mxu0
      %v897 = vadd.f32 %v700, %v896
      %v898 = vpop.f32.mrf.mxu0
      %v899 = vpop.f32.mrf.mxu0
      %v900 = vadd.f32 %v700, %v899
      %v901 = vpop.f32.mrf.mxu0
      %902 = vmatprep.mubr.bf16.mxu0 0
      %903 = vmatmul.mubr.bf16.gmra.mxu0 %v678
      %v904 = vpop.f32.mrf.mxu0
      %v905 = vadd.f32 %v700, %v904
      %v906 = vpop.f32.mrf.mxu0
      %v907 = vpop.f32.mrf.mxu0
      %v908 = vadd.f32 %v700, %v907
      %v909 = vpop.f32.mrf.mxu0
      %910 = vdwg.mxu0
      %v911 = vmax.f32 %v785, 0.0
      %v912 = vmax.f32 %v788, 0.0
      %v913 = vmax.f32 %v793, 0.0
      %v914 = vmax.f32 %v796, 0.0
      %v915 = vmax.f32 %v801, 0.0
      %v916 = vmax.f32 %v804, 0.0
      %v917 = vmax.f32 %v809, 0.0
      %v918 = vmax.f32 %v812, 0.0
      %v919 = vmax.f32 %v817, 0.0
      %v920 = vmax.f32 %v820, 0.0
      %v921 = vmax.f32 %v825, 0.0
      %v922 = vmax.f32 %v828, 0.0
      %v923 = vmax.f32 %v833, 0.0
      %v924 = vmax.f32 %v836, 0.0
      %v925 = vmax.f32 %v841, 0.0
      %v926 = vmax.f32 %v844, 0.0
      %v927 = vmax.f32 %v849, 0.0
      %v928 = vmax.f32 %v852, 0.0
      %v929 = vmax.f32 %v857, 0.0
      %v930 = vmax.f32 %v860, 0.0
      %v931 = vmax.f32 %v865, 0.0
      %v932 = vmax.f32 %v868, 0.0
      %v933 = vmax.f32 %v873, 0.0
      %v934 = vmax.f32 %v876, 0.0
      %v935 = vmax.f32 %v881, 0.0
      %v936 = vmax.f32 %v884, 0.0
      %v937 = vmax.f32 %v889, 0.0
      %v938 = vmax.f32 %v892, 0.0
      %v939 = vmax.f32 %v897, 0.0
      %v940 = vmax.f32 %v900, 0.0
      %v941 = vmax.f32 %v905, 0.0
      %v942 = vmax.f32 %v908, 0.0
      %v943 = vpack.c.bf16 %v912, %v911
      %v944 = vpack.c.bf16 %v914, %v913
      %v945 = vpack.c.bf16 %v916, %v915
      %v946 = vpack.c.bf16 %v918, %v917
      %v947 = vpack.c.bf16 %v920, %v919
      %v948 = vpack.c.bf16 %v922, %v921
      %v949 = vpack.c.bf16 %v924, %v923
      %v950 = vpack.c.bf16 %v926, %v925
      %v951 = vpack.c.bf16 %v928, %v927
      %v952 = vpack.c.bf16 %v930, %v929
      %v953 = vpack.c.bf16 %v932, %v931
      %v954 = vpack.c.bf16 %v934, %v933
      %v955 = vpack.c.bf16 %v936, %v935
      %v956 = vpack.c.bf16 %v938, %v937
      %v957 = vpack.c.bf16 %v940, %v939
      %v958 = vpack.c.bf16 %v942, %v941
      %v959 = vld [vmem:[%s5] sm:$0xf]
      %v960 = vld [vmem:[%s5 + $0x4] sm:$0xf]
      %v961 = vld [vmem:[%s5 + $0x8] sm:$0xf]
      %v962 = vld [vmem:[%s5 + $0xc] sm:$0xf]
      %v963 = vld [vmem:[%s5 + $0x10] sm:$0xf]
      %v964 = vld [vmem:[%s5 + $0x14] sm:$0xf]
      %v965 = vld [vmem:[%s5 + $0x18] sm:$0xf]
      %v966 = vld [vmem:[%s5 + $0x1c] sm:$0xf]
      %v967 = vld [vmem:[%s5 + $0x20] sm:$0xf]
      %v968 = vld [vmem:[%s5 + $0x24] sm:$0xf]
      %v969 = vld [vmem:[%s5 + $0x28] sm:$0xf]
      %v970 = vld [vmem:[%s5 + $0x2c] sm:$0xf]
      %v971 = vld [vmem:[%s5 + $0x30] sm:$0xf]
      %v972 = vld [vmem:[%s5 + $0x34] sm:$0xf]
      %v973 = vld [vmem:[%s5 + $0x38] sm:$0xf]
      %v974 = vld [vmem:[%s5 + $0x3c] sm:$0xf]
      %v975 = vld [vmem:[%s6] sm:$0x1]
      %v977 = vlaneseq
      %v978 = vshrl.u32 %v977, 7
      %v979 = vsub.s32 0, %v978
      %v980 = vrot.slane %v975, %v979
      %v998 = vunpack.c.l.b16 %v959
      %v999 = vunpack.c.l.b16 %v960
      %v1000 = vunpack.c.l.b16 %v961
      %v1001 = vunpack.c.l.b16 %v962
      %v1002 = vunpack.c.l.b16 %v963
      %v1003 = vunpack.c.l.b16 %v964
      %v1004 = vunpack.c.l.b16 %v965
      %v1005 = vunpack.c.l.b16 %v966
      %v1006 = vunpack.c.l.b16 %v967
      %v1007 = vunpack.c.l.b16 %v968
      %v1008 = vunpack.c.l.b16 %v969
      %v1009 = vunpack.c.l.b16 %v970
      %v1010 = vunpack.c.l.b16 %v971
      %v1011 = vunpack.c.l.b16 %v972
      %v1012 = vunpack.c.l.b16 %v973
      %v1013 = vunpack.c.l.b16 %v974
      %v1014 = vpack.c.b16 %v999, %v998
      %v1015 = vpack.c.b16 %v1001, %v1000
      %v1016 = vpack.c.b16 %v1003, %v1002
      %v1017 = vpack.c.b16 %v1005, %v1004
      %v1018 = vpack.c.b16 %v1007, %v1006
      %v1019 = vpack.c.b16 %v1009, %v1008
      %v1020 = vpack.c.b16 %v1011, %v1010
      %v1021 = vpack.c.b16 %v1013, %v1012
      %1030 = vmatprep.subr.bf16.mxu0 0
      %1031 = vmatpush1.bf16.msra.mxu0 %v1021
      %1032 = vmatprep.subr.bf16.mxu0 0
      %1033 = vmatpush1.bf16.msra.mxu0 %v1020
      %1034 = vmatprep.subr.bf16.mxu0 0
      %1035 = vmatpush1.bf16.msra.mxu0 %v1019
      %1036 = vmatprep.subr.bf16.mxu0 0
      %1037 = vmatpush1.bf16.msra.mxu0 %v1018
      %1038 = vmatprep.subr.bf16.mxu0 0
      %1039 = vmatpush1.bf16.msra.mxu0 %v1017
      %1040 = vmatprep.subr.bf16.mxu0 0
      %1041 = vmatpush1.bf16.msra.mxu0 %v1016
      %1042 = vmatprep.subr.bf16.mxu0 0
      %1043 = vmatpush1.bf16.msra.mxu0 %v1015
      %1044 = vmatprep.subr.bf16.mxu0 0
      %1045 = vmatpush1.bf16.msra.mxu0 %v1014
      %1046 = vmatprep.subr.bf16.mxu0 0
      %1047 = vmatpush2.bf16.msra.mxu0 0
      %1048 = vmatprep.subr.bf16.mxu0 0
      %1049 = vmatpush2.bf16.msra.mxu0 0
      %1050 = vmatprep.subr.bf16.mxu0 0
      %1051 = vmatpush2.bf16.msra.mxu0 0
      %1052 = vmatprep.subr.bf16.mxu0 0
      %1053 = vmatpush2.bf16.msra.mxu0 0
      %1054 = vmatprep.subr.bf16.mxu0 0
      %1055 = vmatpush2.bf16.msra.mxu0 0
      %1056 = vmatprep.subr.bf16.mxu0 0
      %1057 = vmatpush2.bf16.msra.mxu0 0
      %1058 = vmatprep.subr.bf16.mxu0 0
      %1059 = vmatpush2.bf16.msra.mxu0 0
      %1060 = vmatprep.subr.bf16.mxu0 0
      %1061 = vmatpush2.bf16.msra.mxu0 0
      %1062 = vmatprep.mubr.bf16.mxu0 0
      %1063 = vmatmul.mubr.bf16.gmra.mxu0 %v943
      %v1064 = vpop.f32.mrf.mxu0
      %v1065 = vadd.f32 %v980, %v1064
      %v1066 = vpop.f32.mrf.mxu0
      %v1067 = vpop.f32.mrf.mxu0
      %v1068 = vadd.f32 %v980, %v1067
      %v1069 = vpop.f32.mrf.mxu0
      %1070 = vmatprep.mubr.bf16.mxu0 0
      %1071 = vmatmul.mubr.bf16.gmra.mxu0 %v944
      %v1072 = vpop.f32.mrf.mxu0
      %v1073 = vadd.f32 %v980, %v1072
      %v1074 = vpop.f32.mrf.mxu0
      %v1075 = vpop.f32.mrf.mxu0
      %v1076 = vadd.f32 %v980, %v1075
      %v1077 = vpop.f32.mrf.mxu0
      %1078 = vmatprep.mubr.bf16.mxu0 0
      %1079 = vmatmul.mubr.bf16.gmra.mxu0 %v945
      %v1080 = vpop.f32.mrf.mxu0
      %v1081 = vadd.f32 %v980, %v1080
      %v1082 = vpop.f32.mrf.mxu0
      %v1083 = vpop.f32.mrf.mxu0
      %v1084 = vadd.f32 %v980, %v1083
      %v1085 = vpop.f32.mrf.mxu0
      %1086 = vmatprep.mubr.bf16.mxu0 0
      %1087 = vmatmul.mubr.bf16.gmra.mxu0 %v946
      %v1088 = vpop.f32.mrf.mxu0
      %v1089 = vadd.f32 %v980, %v1088
      %v1090 = vpop.f32.mrf.mxu0
      %v1091 = vpop.f32.mrf.mxu0
      %v1092 = vadd.f32 %v980, %v1091
      %v1093 = vpop.f32.mrf.mxu0
      %1094 = vmatprep.mubr.bf16.mxu0 0
      %1095 = vmatmul.mubr.bf16.gmra.mxu0 %v947
      %v1096 = vpop.f32.mrf.mxu0
      %v1097 = vadd.f32 %v980, %v1096
      %v1098 = vpop.f32.mrf.mxu0
      %v1099 = vpop.f32.mrf.mxu0
      %v1100 = vadd.f32 %v980, %v1099
      %v1101 = vpop.f32.mrf.mxu0
      %1102 = vmatprep.mubr.bf16.mxu0 0
      %1103 = vmatmul.mubr.bf16.gmra.mxu0 %v948
      %v1104 = vpop.f32.mrf.mxu0
      %v1105 = vadd.f32 %v980, %v1104
      %v1106 = vpop.f32.mrf.mxu0
      %v1107 = vpop.f32.mrf.mxu0
      %v1108 = vadd.f32 %v980, %v1107
      %v1109 = vpop.f32.mrf.mxu0
      %1110 = vmatprep.mubr.bf16.mxu0 0
      %1111 = vmatmul.mubr.bf16.gmra.mxu0 %v949
      %v1112 = vpop.f32.mrf.mxu0
      %v1113 = vadd.f32 %v980, %v1112
      %v1114 = vpop.f32.mrf.mxu0
      %v1115 = vpop.f32.mrf.mxu0
      %v1116 = vadd.f32 %v980, %v1115
      %v1117 = vpop.f32.mrf.mxu0
      %1118 = vmatprep.mubr.bf16.mxu0 0
      %1119 = vmatmul.mubr.bf16.gmra.mxu0 %v950
      %v1120 = vpop.f32.mrf.mxu0
      %v1121 = vadd.f32 %v980, %v1120
      %v1122 = vpop.f32.mrf.mxu0
      %v1123 = vpop.f32.mrf.mxu0
      %v1124 = vadd.f32 %v980, %v1123
      %v1125 = vpop.f32.mrf.mxu0
      %1126 = vmatprep.mubr.bf16.mxu0 0
      %1127 = vmatmul.mubr.bf16.gmra.mxu0 %v951
      %v1128 = vpop.f32.mrf.mxu0
      %v1129 = vadd.f32 %v980, %v1128
      %v1130 = vpop.f32.mrf.mxu0
      %v1131 = vpop.f32.mrf.mxu0
      %v1132 = vadd.f32 %v980, %v1131
      %v1133 = vpop.f32.mrf.mxu0
      %1134 = vmatprep.mubr.bf16.mxu0 0
      %1135 = vmatmul.mubr.bf16.gmra.mxu0 %v952
      %v1136 = vpop.f32.mrf.mxu0
      %v1137 = vadd.f32 %v980, %v1136
      %v1138 = vpop.f32.mrf.mxu0
      %v1139 = vpop.f32.mrf.mxu0
      %v1140 = vadd.f32 %v980, %v1139
      %v1141 = vpop.f32.mrf.mxu0
      %1142 = vmatprep.mubr.bf16.mxu0 0
      %1143 = vmatmul.mubr.bf16.gmra.mxu0 %v953
      %v1144 = vpop.f32.mrf.mxu0
      %v1145 = vadd.f32 %v980, %v1144
      %v1146 = vpop.f32.mrf.mxu0
      %v1147 = vpop.f32.mrf.mxu0
      %v1148 = vadd.f32 %v980, %v1147
      %v1149 = vpop.f32.mrf.mxu0
      %1150 = vmatprep.mubr.bf16.mxu0 0
      %1151 = vmatmul.mubr.bf16.gmra.mxu0 %v954
      %v1152 = vpop.f32.mrf.mxu0
      %v1153 = vadd.f32 %v980, %v1152
      %v1154 = vpop.f32.mrf.mxu0
      %v1155 = vpop.f32.mrf.mxu0
      %v1156 = vadd.f32 %v980, %v1155
      %v1157 = vpop.f32.mrf.mxu0
      %1158 = vmatprep.mubr.bf16.mxu0 0
      %1159 = vmatmul.mubr.bf16.gmra.mxu0 %v955
      %v1160 = vpop.f32.mrf.mxu0
      %v1161 = vadd.f32 %v980, %v1160
      %v1162 = vpop.f32.mrf.mxu0
      %v1163 = vpop.f32.mrf.mxu0
      %v1164 = vadd.f32 %v980, %v1163
      %v1165 = vpop.f32.mrf.mxu0
      %1166 = vmatprep.mubr.bf16.mxu0 0
      %1167 = vmatmul.mubr.bf16.gmra.mxu0 %v956
      %v1168 = vpop.f32.mrf.mxu0
      %v1169 = vadd.f32 %v980, %v1168
      %v1170 = vpop.f32.mrf.mxu0
      %v1171 = vpop.f32.mrf.mxu0
      %v1172 = vadd.f32 %v980, %v1171
      %v1173 = vpop.f32.mrf.mxu0
      %1174 = vmatprep.mubr.bf16.mxu0 0
      %1175 = vmatmul.mubr.bf16.gmra.mxu0 %v957
      %v1176 = vpop.f32.mrf.mxu0
      %v1177 = vadd.f32 %v980, %v1176
      %v1178 = vpop.f32.mrf.mxu0
      %v1179 = vpop.f32.mrf.mxu0
      %v1180 = vadd.f32 %v980, %v1179
      %v1181 = vpop.f32.mrf.mxu0
      %1182 = vmatprep.mubr.bf16.mxu0 0
      %1183 = vmatmul.mubr.bf16.gmra.mxu0 %v958
      %v1184 = vpop.f32.mrf.mxu0
      %v1185 = vadd.f32 %v980, %v1184
      %v1186 = vpop.f32.mrf.mxu0
      %v1187 = vpop.f32.mrf.mxu0
      %v1188 = vadd.f32 %v980, %v1187
      %v1189 = vpop.f32.mrf.mxu0
      %1190 = vdwg.mxu0
      %v1191 = vpack.c.bf16 %v1068, %v1065
      %v1192 = vpack.c.bf16 %v1076, %v1073
      %v1193 = vpack.c.bf16 %v1084, %v1081
      %v1194 = vpack.c.bf16 %v1092, %v1089
      %v1195 = vpack.c.bf16 %v1100, %v1097
      %v1196 = vpack.c.bf16 %v1108, %v1105
      %v1197 = vpack.c.bf16 %v1116, %v1113
      %v1198 = vpack.c.bf16 %v1124, %v1121
      %v1199 = vpack.c.bf16 %v1132, %v1129
      %v1200 = vpack.c.bf16 %v1140, %v1137
      %v1201 = vpack.c.bf16 %v1148, %v1145
      %v1202 = vpack.c.bf16 %v1156, %v1153
      %v1203 = vpack.c.bf16 %v1164, %v1161
      %v1204 = vpack.c.bf16 %v1172, %v1169
      %v1205 = vpack.c.bf16 %v1180, %v1177
      %v1206 = vpack.c.bf16 %v1188, %v1185
      %v1223 = vunpack.c.l.b16 %v1191
      %v1224 = vunpack.c.h.b16 %v1191
      %v1225 = vunpack.c.l.b16 %v1192
      %v1226 = vunpack.c.h.b16 %v1192
      %v1227 = vunpack.c.l.b16 %v1193
      %v1228 = vunpack.c.h.b16 %v1193
      %v1229 = vunpack.c.l.b16 %v1194
      %v1230 = vunpack.c.h.b16 %v1194
      %v1231 = vunpack.c.l.b16 %v1195
      %v1232 = vunpack.c.h.b16 %v1195
      %v1233 = vunpack.c.l.b16 %v1196
      %v1234 = vunpack.c.h.b16 %v1196
      %v1235 = vunpack.c.l.b16 %v1197
      %v1236 = vunpack.c.h.b16 %v1197
      %v1237 = vunpack.c.l.b16 %v1198
      %v1238 = vunpack.c.h.b16 %v1198
      %v1239 = vunpack.c.l.b16 %v1199
      %v1240 = vunpack.c.h.b16 %v1199
      %v1241 = vunpack.c.l.b16 %v1200
      %v1242 = vunpack.c.h.b16 %v1200
      %v1243 = vunpack.c.l.b16 %v1201
      %v1244 = vunpack.c.h.b16 %v1201
      %v1245 = vunpack.c.l.b16 %v1202
      %v1246 = vunpack.c.h.b16 %v1202
      %v1247 = vunpack.c.l.b16 %v1203
      %v1248 = vunpack.c.h.b16 %v1203
      %v1249 = vunpack.c.l.b16 %v1204
      %v1250 = vunpack.c.h.b16 %v1204
      %v1251 = vunpack.c.l.b16 %v1205
      %v1252 = vunpack.c.h.b16 %v1205
      %v1253 = vunpack.c.l.b16 %v1206
      %v1254 = vunpack.c.h.b16 %v1206
      %v1255 = vpack.c.b16 %v1223, %v1223
      %v1256 = vpack.c.b16 %v1224, %v1224
      %v1257 = vpack.c.b16 %v1225, %v1225
      %v1258 = vpack.c.b16 %v1226, %v1226
      %v1259 = vpack.c.b16 %v1227, %v1227
      %v1260 = vpack.c.b16 %v1228, %v1228
      %v1261 = vpack.c.b16 %v1229, %v1229
      %v1262 = vpack.c.b16 %v1230, %v1230
      %v1263 = vpack.c.b16 %v1231, %v1231
      %v1264 = vpack.c.b16 %v1232, %v1232
      %v1265 = vpack.c.b16 %v1233, %v1233
      %v1266 = vpack.c.b16 %v1234, %v1234
      %v1267 = vpack.c.b16 %v1235, %v1235
      %v1268 = vpack.c.b16 %v1236, %v1236
      %v1269 = vpack.c.b16 %v1237, %v1237
      %v1270 = vpack.c.b16 %v1238, %v1238
      %v1271 = vpack.c.b16 %v1239, %v1239
      %v1272 = vpack.c.b16 %v1240, %v1240
      %v1273 = vpack.c.b16 %v1241, %v1241
      %v1274 = vpack.c.b16 %v1242, %v1242
      %v1275 = vpack.c.b16 %v1243, %v1243
      %v1276 = vpack.c.b16 %v1244, %v1244
      %v1277 = vpack.c.b16 %v1245, %v1245
      %v1278 = vpack.c.b16 %v1246, %v1246
      %v1279 = vpack.c.b16 %v1247, %v1247
      %v1280 = vpack.c.b16 %v1248, %v1248
      %v1281 = vpack.c.b16 %v1249, %v1249
      %v1282 = vpack.c.b16 %v1250, %v1250
      %v1283 = vpack.c.b16 %v1251, %v1251
      %v1284 = vpack.c.b16 %v1252, %v1252
      %v1285 = vpack.c.b16 %v1253, %v1253
      %v1286 = vpack.c.b16 %v1254, %v1254
      %1319 = vst [vmem:[%s316] sm:$0xf] %v1255
      %1320 = vst [vmem:[%s316 + $0x4] sm:$0xf] %v1256
      %1321 = vst [vmem:[%s316 + $0x8] sm:$0xf] %v1257
      %1322 = vst [vmem:[%s316 + $0xc] sm:$0xf] %v1258
      %1323 = vst [vmem:[%s316 + $0x10] sm:$0xf] %v1259
      %1324 = vst [vmem:[%s316 + $0x14] sm:$0xf] %v1260
      %1325 = vst [vmem:[%s316 + $0x18] sm:$0xf] %v1261
      %1326 = vst [vmem:[%s316 + $0x1c] sm:$0xf] %v1262
      %1327 = vst [vmem:[%s316 + $0x20] sm:$0xf] %v1263
      %1328 = vst [vmem:[%s316 + $0x24] sm:$0xf] %v1264
      %1329 = vst [vmem:[%s316 + $0x28] sm:$0xf] %v1265
      %1330 = vst [vmem:[%s316 + $0x2c] sm:$0xf] %v1266
      %1331 = vst [vmem:[%s316 + $0x30] sm:$0xf] %v1267
      %1332 = vst [vmem:[%s316 + $0x34] sm:$0xf] %v1268
      %1333 = vst [vmem:[%s316 + $0x38] sm:$0xf] %v1269
      %1334 = vst [vmem:[%s316 + $0x3c] sm:$0xf] %v1270
      %1335 = vst [vmem:[%s316 + $0x40] sm:$0xf] %v1271
      %1336 = vst [vmem:[%s316 + $0x44] sm:$0xf] %v1272
      %1337 = vst [vmem:[%s316 + $0x48] sm:$0xf] %v1273
      %1338 = vst [vmem:[%s316 + $0x4c] sm:$0xf] %v1274
      %1339 = vst [vmem:[%s316 + $0x50] sm:$0xf] %v1275
      %1340 = vst [vmem:[%s316 + $0x54] sm:$0xf] %v1276
      %1341 = vst [vmem:[%s316 + $0x58] sm:$0xf] %v1277
      %1342 = vst [vmem:[%s316 + $0x5c] sm:$0xf] %v1278
      %1343 = vst [vmem:[%s316 + $0x60] sm:$0xf] %v1279
      %1344 = vst [vmem:[%s316 + $0x64] sm:$0xf] %v1280
      %1345 = vst [vmem:[%s316 + $0x68] sm:$0xf] %v1281
      %1346 = vst [vmem:[%s316 + $0x6c] sm:$0xf] %v1282
      %1347 = vst [vmem:[%s316 + $0x70] sm:$0xf] %v1283
      %1348 = vst [vmem:[%s316 + $0x74] sm:$0xf] %v1284
      %1349 = vst [vmem:[%s316 + $0x78] sm:$0xf] %v1285
      %1350 = vst [vmem:[%s316 + $0x7c] sm:$0xf] %v1286
      %s1351 = smul.u32 32, %s23
      %p1352 = scmp.lt.s32.totalorder %s22, 1
      %s1353 = scalar_select %p1352, %s22, 1
      %p1354 = scmp.lt.s32.totalorder %s1351, 31
      %s1355 = scalar_select %p1354, %s1351, 31
      %s1356 = smul.addr %s1353, 32
      %s1357 = sadd.s32 %s1355, %s1356
      %s1358 = smul.addr %s1357, 4
      %s1359 = scalar_lea.vmem %s7, %s1358
      // Predicated region
      $region49: #{forward.1} parent=47 // pred_check
        %p1360 = pneg %p204
      $region50: #{forward.1} parent=47 // pred_check_branch
        %1362 = sbr.rel (%p1360) target = $region52
      $region51: #{forward.1} parent=47 // pred_region
        %s1363 = smul.u32 32, %s23
      $region52: #{forward.1} parent=47 // pred_fallthru
        _
    $region48: #{forward.1} parent=5 // pred_fallthru
      _
    %p1364 = scmp.le.s32.totalorder 2, %s13
    // Predicated region
    $region53: #{forward.1} parent=5 // pred_check
      %p1365 = pneg %p1364
    $region54: #{forward.1} parent=5 // pred_check_branch
      %1367 = sbr.rel (%p1365) target = $region56
    $region55: #{forward.1} parent=5 // pred_region
      %s1368 = ssub.s32 %s13, 2
      // Predicated region
      $region57: #{forward.1} parent=55 // pred_check
        %p1369 = pneg %p210
      $region58: #{forward.1} parent=55 // pred_check_branch
        %1371 = sbr.rel (%p1369) target = $region60
      $region59: #{forward.1} parent=55 // pred_region
        %s1372 = smul.u32 32, %s25
        %p1373 = scmp.lt.s32.totalorder %s24, 1
        %s1374 = scalar_select %p1373, %s24, 1
        %p1375 = scmp.lt.s32.totalorder %s1372, 31
        %s1376 = scalar_select %p1375, %s1372, 31
        %s1377 = smul.addr %s1374, 32
        %s1378 = sadd.s32 %s1376, %s1377
        %s1379 = smul.addr %s1378, 4
        %s1380 = scalar_lea.vmem %s7, %s1379
      $region60: #{forward.1} parent=55 // pred_fallthru
        _
    $region56: #{forward.1} parent=5 // pred_fallthru
      _
  $region6: #{forward.1} parent=0 // loop_footer
    %s17 = sadd.s32 1, %s13
  $region7: #{forward.1} parent=0 // loop_footer_branch
    %12 = sbr.rel target = $region3
  $region8: #{forward.1} parent=0 // loop_exit
    _

</llo_original>
